<compile_context>
chip_gen: v7x
topology: tpu7x:2x2x1
jax: 0.10.0
libtpu: 0.0.40
codegen_flags: <defaults>
</compile_context>

<pallas_src>
import functools

import jax
import jax.numpy as jnp
from jax import lax
from jax.experimental import pallas as pl
from jax.experimental.pallas import tpu as pltpu

BN_EPS = 1e-5
_LANE = 128


def _round_up(x, m):
    return (x + m - 1) // m * m


# ---------------------------------------------------------------------------
# Pass 1: conv-as-matmul (transposed) + per-chunk BN partial sums
# ---------------------------------------------------------------------------
def _conv_stats_kernel(pt_ref, wt_ref, y_ref, psum_ref, psq_ref):
    # pt_ref : (K, TM)     im2col patches, transposed (lane dim = M tile)
    # wt_ref : (Cout, K)   conv weight, transposed (grid-resident)
    # y_ref  : (Cout, TM)  conv output tile, f32
    # psum_ref / psq_ref : (1, Cout, 1) per-parallel-chunk channel sum / sum-of-squares
    y = jnp.dot(wt_ref[...], pt_ref[...], preferred_element_type=jnp.float32)
    y_ref[...] = y

    s = jnp.sum(y, axis=1, keepdims=True)         # (Cout, 1) cross-lane reduce (XLU)
    sq = jnp.sum(y * y, axis=1, keepdims=True)    # (Cout, 1)

    @pl.when(pl.program_id(1) == 0)
    def _init():
        psum_ref[...] = s[None]
        psq_ref[...] = sq[None]

    @pl.when(pl.program_id(1) != 0)
    def _accum():
        psum_ref[...] += s[None]
        psq_ref[...] += sq[None]


# ---------------------------------------------------------------------------
# Pass 2: y * scale + shift, ReLU  (one FMA + one max per element)
# ---------------------------------------------------------------------------
def _bn_relu_kernel(y_ref, scale_ref, shift_ref, o_ref):
    o_ref[...] = jnp.maximum(y_ref[...] * scale_ref[...] + shift_ref[...], 0.0)


# ---------------------------------------------------------------------------
# Wrapper
# ---------------------------------------------------------------------------
@functools.partial(jax.jit,
                   static_argnames=("stride", "padding", "tile_m", "compute_dtype"))
def downblock2d(x_nchw, conv_w, conv_b, bn_gamma, bn_beta, *,
                stride=2, padding=1, tile_m=2048, compute_dtype=jnp.float32):
    """x_nchw: (N, Cin, H, W); conv_w: (Cout, Cin, KH, KW)."""
    del conv_b  # exactly cancelled by the training-mode BN mean subtraction

    N, Cin, H, W = x_nchw.shape
    Cout, _, KH, KW = conv_w.shape
    Ho = (H + 2 * padding - KH) // stride + 1
    Wo = (W + 2 * padding - KW) // stride + 1
    M = N * Ho * Wo
    K = KH * KW * Cin

    # ---- glue: NCHW -> NHWC, pad, im2col (transposed: (K, M)) ----
    x = jnp.transpose(x_nchw, (0, 2, 3, 1)).astype(jnp.float32)
    xp = jnp.pad(x, ((0, 0), (padding, padding), (padding, padding), (0, 0)))
    taps = [xp[:, kh:kh + stride * Ho:stride, kw:kw + stride * Wo:stride, :]
            for kh in range(KH) for kw in range(KW)]
    pt = jnp.stack(taps, axis=0)                              # (KH*KW, N, Ho, Wo, Cin)
    pt = jnp.transpose(pt, (0, 4, 1, 2, 3)).reshape(K, M)     # rows (kh,kw,cin), cols (n,ho,wo)
    # TODO(synk): move im2col into pass 1 (manual DMA of overlapping input row bands)
    # to remove the ~KH*KW x HBM expansion of the patch matrix (biggest remaining win
    # on v5e/v6e where the kernel is HBM-bound).

    wt = jnp.transpose(conv_w, (0, 2, 3, 1)).reshape(Cout, K).astype(compute_dtype)

    # ---- tiling over M (lane axis): tile must be a multiple of 128 ----
    tm = min(tile_m, _round_up(M, _LANE))
    n_tiles = pl.cdiv(M, tm)
    nc = 2 if n_tiles >= 2 else 1        # parallel chunks: lets v7x use both TensorCores
    n_tiles = _round_up(n_tiles, nc)
    mt = n_tiles // nc
    Mp = n_tiles * tm
    # zero-padded columns contribute 0 to sum/sumsq; we divide by the true M below.
    pt = jnp.pad(pt, ((0, 0), (0, Mp - M))).astype(compute_dtype)

    itemsize = jnp.dtype(compute_dtype).itemsize
    blk_bytes = K * tm * itemsize + Cout * tm * 4
    # double-buffered tiles are tiny here; keep limit modest so it fits v7x's 64 MiB VMEM
    vmem_limit = int(min(48 * 1024 * 1024, max(32 * 1024 * 1024, 6 * blk_bytes)))

    # ---- pass 1: conv + partial BN sums ----
    cost1 = pl.CostEstimate(
        flops=2 * Cout * K * Mp + 4 * Cout * Mp,
        transcendentals=0,
        bytes_accessed=pt.size * itemsize + wt.size * itemsize + Cout * Mp * 4)
    y_t, psum, psq = pl.pallas_call(
        _conv_stats_kernel,
        out_shape=(jax.ShapeDtypeStruct((Cout, Mp), jnp.float32),
                   jax.ShapeDtypeStruct((nc, Cout, 1), jnp.float32),
                   jax.ShapeDtypeStruct((nc, Cout, 1), jnp.float32)),
        grid=(nc, mt),
        in_specs=[pl.BlockSpec((K, tm), lambda c, i: (0, c * mt + i)),
                  pl.BlockSpec((Cout, K), lambda c, i: (0, 0))],
        out_specs=(pl.BlockSpec((Cout, tm), lambda c, i: (0, c * mt + i)),
                   pl.BlockSpec((1, Cout, 1), lambda c, i: (c, 0, 0)),
                   pl.BlockSpec((1, Cout, 1), lambda c, i: (c, 0, 0))),
        compiler_params=pltpu.CompilerParams(
            dimension_semantics=("parallel", "arbitrary"),
            vmem_limit_bytes=vmem_limit),
        cost_estimate=cost1,
    )(pt, wt)

    # ---- glue: O(Cout) finalize of BN batch statistics -> per-channel scale/shift ----
    ssum = jnp.sum(psum, axis=0)                       # (Cout, 1)
    ssq = jnp.sum(psq, axis=0)                         # (Cout, 1)
    mean = ssum / M
    var = jnp.maximum(ssq / M - mean * mean, 0.0)      # clamp guards fp cancellation
    rstd = lax.rsqrt(var + BN_EPS)
    scale = bn_gamma.reshape(Cout, 1).astype(jnp.float32) * rstd
    shift = bn_beta.reshape(Cout, 1).astype(jnp.float32) - mean * scale

    # ---- pass 2: normalize + ReLU ----
    cost2 = pl.CostEstimate(flops=3 * Cout * Mp, transcendentals=0,
                            bytes_accessed=2 * Cout * Mp * 4)
    out_t = pl.pallas_call(
        _bn_relu_kernel,
        out_shape=jax.ShapeDtypeStruct((Cout, Mp), jnp.float32),
        grid=(n_tiles,),
        in_specs=[pl.BlockSpec((Cout, tm), lambda i: (0, i)),
                  pl.BlockSpec((Cout, 1), lambda i: (0, 0)),
                  pl.BlockSpec((Cout, 1), lambda i: (0, 0))],
        out_specs=pl.BlockSpec((Cout, tm), lambda i: (0, i)),
        compiler_params=pltpu.CompilerParams(
            dimension_semantics=("parallel",),
            vmem_limit_bytes=vmem_limit),
        cost_estimate=cost2,
    )(y_t, scale, shift)

    # ---- glue: (Cout, M) -> NCHW ----
    out = out_t[:, :M].reshape(Cout, N, Ho, Wo)
    return jnp.transpose(out, (1, 0, 2, 3))


# ---------------------------------------------------------------------------
# Pure-JAX reference (with bias, training-mode BN) for validation
# ---------------------------------------------------------------------------
def _reference(x_nchw, conv_w, conv_b, bn_gamma, bn_beta, *, stride=2, padding=1):
    y = lax.conv_general_dilated(
        x_nchw.astype(jnp.float32), conv_w.astype(jnp.float32),
        window_strides=(stride, stride),
        padding=[(padding, padding), (padding, padding)],
        dimension_numbers=("NCHW", "OIHW", "NCHW"),
    ) + conv_b.reshape(1, -1, 1, 1)
    mean = jnp.mean(y, axis=(0, 2, 3), keepdims=True)
    var = jnp.mean((y - mean) ** 2, axis=(0, 2, 3), keepdims=True)
    y = (y - mean) * lax.rsqrt(var + BN_EPS)
    y = y * bn_gamma.reshape(1, -1, 1, 1) + bn_beta.reshape(1, -1, 1, 1)
    return jnp.maximum(y, 0.0)


if __name__ == "__main__":
    key = jax.random.PRNGKey(0)
    k_x, k_w, k_b, k_g, k_be = jax.random.split(key, 5)

    N, Cin, H, W = 2, 4, 16, 16
    Cout, KH, KW = 8, 3, 3

    x = jax.random.normal(k_x, (N, Cin, H, W), dtype=jnp.float32)
    conv_w = jax.random.normal(k_w, (Cout, Cin, KH, KW), dtype=jnp.float32) * 0.1
    conv_b = jax.random.normal(k_b, (Cout,), dtype=jnp.float32) * 0.1
    bn_gamma = 1.0 + 0.1 * jax.random.normal(k_g, (Cout,), dtype=jnp.float32)
    bn_beta = 0.1 * jax.random.normal(k_be, (Cout,), dtype=jnp.float32)

    out = jax.block_until_ready(downblock2d(x, conv_w, conv_b, bn_gamma, bn_beta))
    ref = jax.block_until_ready(_reference(x, conv_w, conv_b, bn_gamma, bn_beta))

    assert out.shape == (N, Cout, H // 2, W // 2), out.shape
    max_err = float(jnp.max(jnp.abs(out - ref)))
    assert jnp.allclose(out, ref, atol=2e-4, rtol=2e-4), max_err

    print("KERNEL_OK")
</pallas_src>

<mosaic_0001>
module attributes {stable_mosaic.version = 11 : i64} {
  func.func @_conv_stats_kernel(%arg0: i32, %arg1: i32, %arg2: memref<36x128xf32, #tpu.memory_space<vmem>>, %arg3: memref<8x36xf32, #tpu.memory_space<vmem>>, %arg4: memref<8x128xf32, #tpu.memory_space<vmem>>, %arg5: memref<1x8x1xf32, #tpu.memory_space<vmem>>, %arg6: memref<1x8x1xf32, #tpu.memory_space<vmem>>) attributes {dimension_semantics = [#tpu.dimension_semantics<parallel>, #tpu.dimension_semantics<arbitrary>], iteration_bounds = array<i64: 1, 1>, scalar_prefetch = 0 : i64, scratch_operands = 0 : i64, tpu.core_type = #tpu.core_type<tc>, window_params = [{transform_indices = @transform_0, window_bounds = array<i64: 36, 128>}, {pipeline_mode = #tpu.pipeline_mode<synchronous>, transform_indices = @transform_1, window_bounds = array<i64: 8, 36>}, {transform_indices = @transform_2, window_bounds = array<i64: 8, 128>}, {transform_indices = @transform_3, window_bounds = array<i64: 1, 8, 1>}, {transform_indices = @transform_4, window_bounds = array<i64: 1, 8, 1>}]} {
    %c0 = arith.constant 0 : index
    %c0_0 = arith.constant 0 : index
    %0 = vector.load %arg3[%c0, %c0_0] : memref<8x36xf32, #tpu.memory_space<vmem>>, vector<8x36xf32>
    %c0_1 = arith.constant 0 : index
    %c0_2 = arith.constant 0 : index
    %1 = vector.load %arg2[%c0_1, %c0_2] : memref<36x128xf32, #tpu.memory_space<vmem>>, vector<36x128xf32>
    %cst = arith.constant dense<0.000000e+00> : vector<8x128xf32>
    %2 = tpu.matmul %0, %1, %cst {dimension_numbers = #tpu.dot_dimension_numbers<[1], [0], [0], [1], [0, 0, 1, 1], [], []>} : vector<8x36xf32>, vector<36x128xf32>, vector<8x128xf32> -> vector<8x128xf32>
    %c0_3 = arith.constant 0 : index
    %c0_4 = arith.constant 0 : index
    %3 = vector.load %arg4[%c0_3, %c0_4] : memref<8x128xf32, #tpu.memory_space<vmem>>, vector<8x128xf32>
    tpu.vector_store %arg4[%c0_3, %c0_4], %2 {strides = array<i32>} : memref<8x128xf32, #tpu.memory_space<vmem>>, vector<8x128xf32>,
    %cst_5 = arith.constant dense<0.000000e+00> : vector<8xf32>
    %4 = vector.multi_reduction <add>, %2, %cst_5 [1] : vector<8x128xf32> to vector<8xf32>
    %5 = vector.shape_cast %4 : vector<8xf32> to vector<8x1xf32>
    %6 = arith.mulf %2, %2 : vector<8x128xf32>
    %cst_6 = arith.constant dense<0.000000e+00> : vector<8xf32>
    %7 = vector.multi_reduction <add>, %6, %cst_6 [1] : vector<8x128xf32> to vector<8xf32>
    %8 = vector.shape_cast %7 : vector<8xf32> to vector<8x1xf32>
    %c0_i32 = arith.constant 0 : i32
    %9 = arith.cmpi eq, %arg1, %c0_i32 : i32
    %10 = arith.extui %9 : i1 to i32
    %c0_i32_7 = arith.constant 0 : i32
    %11 = arith.cmpi ne, %10, %c0_i32_7 : i32
    scf.if %11 {
      %15 = vector.shape_cast %5 : vector<8x1xf32> to vector<1x8x1xf32>
      %c0_10 = arith.constant 0 : index
      %c0_11 = arith.constant 0 : index
      %c0_12 = arith.constant 0 : index
      %16 = vector.load %arg5[%c0_10, %c0_11, %c0_12] : memref<1x8x1xf32, #tpu.memory_space<vmem>>, vector<1x8x1xf32>
      tpu.vector_store %arg5[%c0_10, %c0_11, %c0_12], %15 {strides = array<i32>} : memref<1x8x1xf32, #tpu.memory_space<vmem>>, vector<1x8x1xf32>,
      %17 = vector.shape_cast %8 : vector<8x1xf32> to vector<1x8x1xf32>
      %c0_13 = arith.constant 0 : index
      %c0_14 = arith.constant 0 : index
      %c0_15 = arith.constant 0 : index
      %18 = vector.load %arg6[%c0_13, %c0_14, %c0_15] : memref<1x8x1xf32, #tpu.memory_space<vmem>>, vector<1x8x1xf32>
      tpu.vector_store %arg6[%c0_13, %c0_14, %c0_15], %17 {strides = array<i32>} : memref<1x8x1xf32, #tpu.memory_space<vmem>>, vector<1x8x1xf32>,
    } else {
    }
    %c0_i32_8 = arith.constant 0 : i32
    %12 = arith.cmpi ne, %arg1, %c0_i32_8 : i32
    %13 = arith.extui %12 : i1 to i32
    %c0_i32_9 = arith.constant 0 : i32
    %14 = arith.cmpi ne, %13, %c0_i32_9 : i32
    scf.if %14 {
      %c0_10 = arith.constant 0 : index
      %c0_11 = arith.constant 0 : index
      %c0_12 = arith.constant 0 : index
      %15 = vector.load %arg5[%c0_10, %c0_11, %c0_12] : memref<1x8x1xf32, #tpu.memory_space<vmem>>, vector<1x8x1xf32>
      %16 = vector.shape_cast %5 : vector<8x1xf32> to vector<1x8x1xf32>
      %17 = arith.addf %15, %16 : vector<1x8x1xf32>
      %c0_13 = arith.constant 0 : index
      %c0_14 = arith.constant 0 : index
      %c0_15 = arith.constant 0 : index
      %18 = vector.load %arg5[%c0_13, %c0_14, %c0_15] : memref<1x8x1xf32, #tpu.memory_space<vmem>>, vector<1x8x1xf32>
      tpu.vector_store %arg5[%c0_13, %c0_14, %c0_15], %17 {strides = array<i32>} : memref<1x8x1xf32, #tpu.memory_space<vmem>>, vector<1x8x1xf32>,
      %c0_16 = arith.constant 0 : index
      %c0_17 = arith.constant 0 : index
      %c0_18 = arith.constant 0 : index
      %19 = vector.load %arg6[%c0_16, %c0_17, %c0_18] : memref<1x8x1xf32, #tpu.memory_space<vmem>>, vector<1x8x1xf32>
      %20 = vector.shape_cast %8 : vector<8x1xf32> to vector<1x8x1xf32>
      %21 = arith.addf %19, %20 : vector<1x8x1xf32>
      %c0_19 = arith.constant 0 : index
      %c0_20 = arith.constant 0 : index
      %c0_21 = arith.constant 0 : index
      %22 = vector.load %arg6[%c0_19, %c0_20, %c0_21] : memref<1x8x1xf32, #tpu.memory_space<vmem>>, vector<1x8x1xf32>
      tpu.vector_store %arg6[%c0_19, %c0_20, %c0_21], %21 {strides = array<i32>} : memref<1x8x1xf32, #tpu.memory_space<vmem>>, vector<1x8x1xf32>,
    } else {
    }
    return
  }
  func.func @transform_0(%arg0: i32, %arg1: i32) -> (i32, i32) {
    %c1_i32 = arith.constant 1 : i32
    %0 = arith.muli %arg0, %c1_i32 : i32
    %1 = arith.addi %0, %arg1 : i32
    %c0_i32 = arith.constant 0 : i32
    %c0_i32_0 = arith.constant 0 : i32
    return %c0_i32, %1 : i32, i32
  }
  func.func @transform_1(%arg0: i32, %arg1: i32) -> (i32, i32) {
    %c0_i32 = arith.constant 0 : i32
    %c0_i32_0 = arith.constant 0 : i32
    %c0_i32_1 = arith.constant 0 : i32
    return %c0_i32, %c0_i32_0 : i32, i32
  }
  func.func @transform_2(%arg0: i32, %arg1: i32) -> (i32, i32) {
    %c1_i32 = arith.constant 1 : i32
    %0 = arith.muli %arg0, %c1_i32 : i32
    %1 = arith.addi %0, %arg1 : i32
    %c0_i32 = arith.constant 0 : i32
    %c0_i32_0 = arith.constant 0 : i32
    return %c0_i32, %1 : i32, i32
  }
  func.func @transform_3(%arg0: i32, %arg1: i32) -> (i32, i32, i32) {
    %c0_i32 = arith.constant 0 : i32
    %c0_i32_0 = arith.constant 0 : i32
    %c0_i32_1 = arith.constant 0 : i32
    return %arg0, %c0_i32, %c0_i32_0 : i32, i32, i32
  }
  func.func @transform_4(%arg0: i32, %arg1: i32) -> (i32, i32, i32) {
    %c0_i32 = arith.constant 0 : i32
    %c0_i32_0 = arith.constant 0 : i32
    %c0_i32_1 = arith.constant 0 : i32
    return %arg0, %c0_i32, %c0_i32_0 : i32, i32, i32
  }
}

module attributes {stable_mosaic.version = 11 : i64} {
  func.func @_bn_relu_kernel(%arg0: i32, %arg1: memref<8x128xf32, #tpu.memory_space<vmem>>, %arg2: memref<8x1xf32, #tpu.memory_space<vmem>>, %arg3: memref<8x1xf32, #tpu.memory_space<vmem>>, %arg4: memref<8x128xf32, #tpu.memory_space<vmem>>) attributes {dimension_semantics = [#tpu.dimension_semantics<parallel>], iteration_bounds = array<i64: 1>, scalar_prefetch = 0 : i64, scratch_operands = 0 : i64, tpu.core_type = #tpu.core_type<tc>, window_params = [{transform_indices = @transform_0, window_bounds = array<i64: 8, 128>}, {pipeline_mode = #tpu.pipeline_mode<synchronous>, transform_indices = @transform_1, window_bounds = array<i64: 8, 1>}, {pipeline_mode = #tpu.pipeline_mode<synchronous>, transform_indices = @transform_2, window_bounds = array<i64: 8, 1>}, {transform_indices = @transform_3, window_bounds = array<i64: 8, 128>}]} {
    %c0 = arith.constant 0 : index
    %c0_0 = arith.constant 0 : index
    %0 = vector.load %arg1[%c0, %c0_0] : memref<8x128xf32, #tpu.memory_space<vmem>>, vector<8x128xf32>
    %c0_1 = arith.constant 0 : index
    %c0_2 = arith.constant 0 : index
    %1 = vector.load %arg2[%c0_1, %c0_2] : memref<8x1xf32, #tpu.memory_space<vmem>>, vector<8x1xf32>
    %2 = vector.broadcast %1 : vector<8x1xf32> to vector<8x128xf32>
    %3 = arith.mulf %0, %2 : vector<8x128xf32>
    %c0_3 = arith.constant 0 : index
    %c0_4 = arith.constant 0 : index
    %4 = vector.load %arg3[%c0_3, %c0_4] : memref<8x1xf32, #tpu.memory_space<vmem>>, vector<8x1xf32>
    %5 = vector.broadcast %4 : vector<8x1xf32> to vector<8x128xf32>
    %6 = arith.addf %3, %5 : vector<8x128xf32>
    %cst = arith.constant 0.000000e+00 : f32
    %7 = vector.broadcast %cst : f32 to vector<8x128xf32>
    %8 = arith.maximumf %6, %7 : vector<8x128xf32>
    %c0_5 = arith.constant 0 : index
    %c0_6 = arith.constant 0 : index
    %9 = vector.load %arg4[%c0_5, %c0_6] : memref<8x128xf32, #tpu.memory_space<vmem>>, vector<8x128xf32>
    tpu.vector_store %arg4[%c0_5, %c0_6], %8 {strides = array<i32>} : memref<8x128xf32, #tpu.memory_space<vmem>>, vector<8x128xf32>,
    return
  }
  func.func @transform_0(%arg0: i32) -> (i32, i32) {
    %c0_i32 = arith.constant 0 : i32
    %c0_i32_0 = arith.constant 0 : i32
    return %c0_i32, %arg0 : i32, i32
  }
  func.func @transform_1(%arg0: i32) -> (i32, i32) {
    %c0_i32 = arith.constant 0 : i32
    %c0_i32_0 = arith.constant 0 : i32
    %c0_i32_1 = arith.constant 0 : i32
    return %c0_i32, %c0_i32_0 : i32, i32
  }
  func.func @transform_2(%arg0: i32) -> (i32, i32) {
    %c0_i32 = arith.constant 0 : i32
    %c0_i32_0 = arith.constant 0 : i32
    %c0_i32_1 = arith.constant 0 : i32
    return %c0_i32, %c0_i32_0 : i32, i32
  }
  func.func @transform_3(%arg0: i32) -> (i32, i32) {
    %c0_i32 = arith.constant 0 : i32
    %c0_i32_0 = arith.constant 0 : i32
    return %c0_i32, %arg0 : i32, i32
  }
}

</mosaic_0001>

<llo_original>
// kernel: downblock2d.3
$region0: #{downblock2d.3}
  #allocation0 [shape = 'u32[]', space=smem, size = 0x4, offset = 0x4, fixed_abs, tag = 'smem constant byte address 0x4 - core index']
  #allocation1 [shape = 'u32[144,128]{1,0:T(1,128)}', space=vmem, size = 0x12000, scoped, tag = 'internal scratch']
  %s0 = inlined_call_operand.vmem [shape: f32[8,128], index: 0, kind: input, shape index: {}]
  %s1 = inlined_call_operand.vmem [shape: f32[8,1], index: 1, kind: input, shape index: {}]
  %s2 = inlined_call_operand.vmem [shape: f32[8,1], index: 2, kind: input, shape index: {}]
  %s3 = inlined_call_operand.vmem [shape: f32[8,128], index: 3, kind: output, shape index: {}]
  %s4 = sld [smem:[#allocation0]]
  $region22: #{downblock2d.3} parent=0
    _
  %s6 = ssub.s32 1, %s4
  %s7 = scalar_select 0, %s6, %s4
  // Predicated region
  $region2: #{downblock2d.3} parent=0 // pred_check
    _
  $region3: #{downblock2d.3} parent=0 // pred_check_branch
    %9 = sbr.rel (0) target = $region5
  $region4: #{downblock2d.3} parent=0 // pred_region
    _
  $region5: #{downblock2d.3} parent=0 // pred_fallthru
    _
  // Predicated region
  $region6: #{downblock2d.3} parent=0 // pred_check
    _
  $region7: #{downblock2d.3} parent=0 // pred_check_branch
    %11 = sbr.rel (0) target = $region9
  $region8: #{downblock2d.3} parent=0 // pred_region
    _
  $region9: #{downblock2d.3} parent=0 // pred_fallthru
    _
  // Predicated region
  $region10: #{downblock2d.3} parent=0 // pred_check
    _
  $region11: #{downblock2d.3} parent=0 // pred_check_branch
    %13 = sbr.rel (0) target = $region13
  $region12: #{downblock2d.3} parent=0 // pred_region
    _
  $region13: #{downblock2d.3} parent=0 // pred_fallthru
    _
  %v14 = vld [vmem:[%s0] sm:$0xff]
  %v15 = vld [vmem:[%s1] sm:$0xff]
  %17 = vset.pattern.permute.xlu0 0
  %18 = vperm.xlu0 %17, %v15
  %v19 = vpop.permute.xlu0 %18
  %v21 = vmul.f32 %v14, %v19
  %v22 = vld [vmem:[%s2] sm:$0xff]
  %24 = vset.pattern.permute.xlu0 0
  %25 = vperm.xlu0 %24, %v22
  %v26 = vpop.permute.xlu0 %25
  %v28 = vadd.f32 %v21, %v26
  %v29 = vmax.f32 %v28, 0.0
  %30 = vst [vmem:[%s3] sm:$0xff] %v29
  // Predicated region
  $region14: #{downblock2d.3} parent=0 // pred_check
    _
  $region15: #{downblock2d.3} parent=0 // pred_check_branch
    %32 = sbr.rel (0) target = $region17
  $region16: #{downblock2d.3} parent=0 // pred_region
    _
  $region17: #{downblock2d.3} parent=0 // pred_fallthru
    _
  // Predicated region
  $region18: #{downblock2d.3} parent=0 // pred_check
    _
  $region19: #{downblock2d.3} parent=0 // pred_check_branch
    %34 = sbr.rel (0) target = $region21
  $region20: #{downblock2d.3} parent=0 // pred_region
    _
  $region21: #{downblock2d.3} parent=0 // pred_fallthru
    _

// kernel: downblock2d.2
$region0: #{downblock2d.2}
  #allocation0 [shape = 'u32[]', space=smem, size = 0x4, offset = 0x4, fixed_abs, tag = 'smem constant byte address 0x4 - core index']
  #allocation1 [shape = 'u32[144,128]{1,0:T(1,128)}', space=vmem, size = 0x12000, scoped, tag = 'internal scratch']
  %s0 = inlined_call_operand.vmem [shape: f32[36,128], index: 0, kind: input, shape index: {}]
  %s1 = inlined_call_operand.vmem [shape: f32[8,36], index: 1, kind: input, shape index: {}]
  %s2 = inlined_call_operand.vmem [shape: f32[8,128], index: 2, kind: output, shape index: {0}]
  %s3 = inlined_call_operand.vmem [shape: f32[1,8,1], index: 3, kind: output, shape index: {1}]
  %s4 = inlined_call_operand.vmem [shape: f32[1,8,1], index: 4, kind: output, shape index: {2}]
  %5 = xla_tuple %s2, %s3, %s4
  %s6 = sld [smem:[#allocation0]]
  $region42: #{downblock2d.2} parent=0
    _
  %s8 = ssub.s32 1, %s6
  %s9 = scalar_select 0, %s8, %s6
  // Predicated region
  $region2: #{downblock2d.2} parent=0 // pred_check
    _
  $region3: #{downblock2d.2} parent=0 // pred_check_branch
    %11 = sbr.rel (0) target = $region5
  $region4: #{downblock2d.2} parent=0 // pred_region
    %s12 = sadd.s32 0, 0
    %p13 = scmp.lt.s32.totalorder %s12, 0
    %s14 = scalar_select %p13, %s12, 0
    %s15 = smul.addr %s14, 8
    %s16 = scalar_lea.vmem %s0, %s15
    %s17 = sadd.s32 0, 0
  $region5: #{downblock2d.2} parent=0 // pred_fallthru
    _
  // Predicated region
  $region6: #{downblock2d.2} parent=0 // pred_check
    _
  $region7: #{downblock2d.2} parent=0 // pred_check_branch
    %19 = sbr.rel (0) target = $region9
  $region8: #{downblock2d.2} parent=0 // pred_region
    _
  $region9: #{downblock2d.2} parent=0 // pred_fallthru
    _
  %s20 = sadd.s32 0, 0
  %p21 = scmp.lt.s32.totalorder %s20, 0
  %s22 = scalar_select %p21, %s20, 0
  %s23 = smul.addr %s22, 8
  %s24 = scalar_lea.vmem %s0, %s23
  %s25 = sadd.s32 0, 0
  %p26 = scmp.lt.s32.totalorder %s25, 0
  %s27 = scalar_select %p26, %s25, 0
  %s28 = smul.addr %s27, 8
  %s29 = scalar_lea.vmem %s2, %s28
  %s30 = sadd.s32 0, 0
  %p31 = scmp.lt.s32.totalorder %s30, 0
  %s32 = scalar_select %p31, %s30, 0
  %s33 = smul.addr %s32, 8
  %s34 = scalar_lea.vmem %s0, %s33
  %s35 = sadd.s32 0, 0
  %s36 = sadd.s32 0, 0
  %p37 = scmp.lt.s32.totalorder %s36, 0
  %s38 = scalar_select %p37, %s36, 0
  %s39 = smul.addr %s38, 8
  %s40 = scalar_lea.vmem %s2, %s39
  %s41 = sadd.s32 0, 0
  %v42 = vld [vmem:[%s1] sm:$0xff]
  %v43 = vld [vmem:[%s34] sm:$0xff]
  %v44 = vld [vmem:[%s34 + $0x8] sm:$0xff]
  %v45 = vld [vmem:[%s34 + $0x10] sm:$0xff]
  %v46 = vld [vmem:[%s34 + $0x18] sm:$0xff]
  %v47 = vld [vmem:[%s34 + $0x20] sm:$0xf]
  %vm48 = vcmask 293888
  %v50 = vsel %vm48, %v42, 0
  %vm52 = vcmask 1043456
  %v54 = vsel %vm52, %v47, 0
  %56 = vmatprep.subr.mxu0 0.0
  %57 = vmatpush1.msra.mxu0 %v43
  %58 = vmatprep.subr.mxu0 0.0
  %59 = vmatpush1.msra.mxu0 %v44
  %60 = vmatprep.subr.mxu0 0.0
  %61 = vmatpush1.msra.mxu0 %v45
  %62 = vmatprep.subr.mxu0 0.0
  %63 = vmatpush1.msra.mxu0 %v46
  %64 = vmatprep.subr.mxu0 0.0
  %65 = vmatpush1.msra.mxu0 %v54
  %66 = vmatprep.subr.mxu0 0.0
  %67 = vmatpush1.msra.mxu0 0.0
  %68 = vmatprep.subr.mxu0 0.0
  %69 = vmatpush1.msra.mxu0 0.0
  %70 = vmatprep.subr.mxu0 0.0
  %71 = vmatpush1.msra.mxu0 0.0
  %72 = vmatprep.subr.mxu0 0.0
  %73 = vmatpush1.msra.mxu0 0.0
  %74 = vmatprep.subr.mxu0 0.0
  %75 = vmatpush1.msra.mxu0 0.0
  %76 = vmatprep.subr.mxu0 0.0
  %77 = vmatpush1.msra.mxu0 0.0
  %78 = vmatprep.subr.mxu0 0.0
  %79 = vmatpush1.msra.mxu0 0.0
  %80 = vmatprep.subr.mxu0 0.0
  %81 = vmatpush1.msra.mxu0 0.0
  %82 = vmatprep.subr.mxu0 0.0
  %83 = vmatpush1.msra.mxu0 0.0
  %84 = vmatprep.subr.mxu0 0.0
  %85 = vmatpush1.msra.mxu0 0.0
  %86 = vmatprep.subr.mxu0 0.0
  %87 = vmatpush1.msra.mxu0 0.0
  %88 = vmatprep.subr.mxu0 0.0
  %89 = vmatpush1.msra.mxu0 0.0
  %90 = vmatprep.subr.mxu0 0.0
  %91 = vmatpush1.msra.mxu0 0.0
  %92 = vmatprep.subr.mxu0 0.0
  %93 = vmatpush1.msra.mxu0 0.0
  %94 = vmatprep.subr.mxu0 0.0
  %95 = vmatpush1.msra.mxu0 0.0
  %96 = vmatprep.subr.mxu0 0.0
  %97 = vmatpush1.msra.mxu0 0.0
  %98 = vmatprep.subr.mxu0 0.0
  %99 = vmatpush1.msra.mxu0 0.0
  %100 = vmatprep.subr.mxu0 0.0
  %101 = vmatpush1.msra.mxu0 0.0
  %102 = vmatprep.subr.mxu0 0.0
  %103 = vmatpush1.msra.mxu0 0.0
  %104 = vmatprep.subr.mxu0 0.0
  %105 = vmatpush1.msra.mxu0 0.0
  %106 = vmatprep.subr.mxu0 0.0
  %107 = vmatpush1.msra.mxu0 0.0
  %108 = vmatprep.subr.mxu0 0.0
  %109 = vmatpush1.msra.mxu0 0.0
  %110 = vmatprep.subr.mxu0 0.0
  %111 = vmatpush1.msra.mxu0 0.0
  %112 = vmatprep.subr.mxu0 0.0
  %113 = vmatpush1.msra.mxu0 0.0
  %114 = vmatprep.subr.mxu0 0.0
  %115 = vmatpush1.msra.mxu0 0.0
  %116 = vmatprep.subr.mxu0 0.0
  %117 = vmatpush1.msra.mxu0 0.0
  %118 = vmatprep.subr.mxu0 0.0
  %119 = vmatpush1.msra.mxu0 0.0
  %120 = vmatprep.mubr.f32.mxu0 0.0
  %121 = vmatmul.mubr.f32.gmra.mrb[0].mxu0 %v50
  %v122 = vpop.f32.mrb[0].mxu0
  %v123 = vadd.f32 0.0, %v122
  %v124 = vpop.f32.mrb[0].mxu0
  %125 = vdwg.mxu0
  %126 = vst [vmem:[%s40] sm:$0xff] %v123
  %127 = vadd.xlane.f32.xlu0 %v123
  %v128 = vpop.xlane.xlu0 %127
  %v129 = vmul.f32 %v123, %v123
  %130 = vadd.xlane.f32.xlu0 %v129
  %v131 = vpop.xlane.xlu0 %130
  %p132 = scmp.eq.s32.totalorder 0, 0
  // Predicated region
  $region10: #{downblock2d.2} parent=0 // pred_check
    %p133 = pneg %p132
  $region11: #{downblock2d.2} parent=0 // pred_check_branch
    %135 = sbr.rel (%p133) target = $region13
  $region12: #{downblock2d.2} parent=0 // pred_region
    %vm136 = vcmask 7168
    %137 = vst.msk [vmem:[%s3] sm:$0xff] %vm136, %v128
    %138 = vst.msk [vmem:[%s4] sm:$0xff] %vm136, %v131
  $region13: #{downblock2d.2} parent=0 // pred_fallthru
    _
  %p139 = scmp.ne.s32.totalorder 0, 0
  // Predicated region
  $region14: #{downblock2d.2} parent=0 // pred_check
    %p140 = pneg %p139
  $region15: #{downblock2d.2} parent=0 // pred_check_branch
    %142 = sbr.rel (%p140) target = $region17
  $region16: #{downblock2d.2} parent=0 // pred_region
    %v143 = vld [vmem:[%s3] sm:$0xff]
    %v144 = vadd.f32 %v143, %v128
    %vm145 = vcmask 7168
    %146 = vst.msk [vmem:[%s3] sm:$0xff] %vm145, %v144
    %v147 = vld [vmem:[%s4] sm:$0xff]
    %v148 = vadd.f32 %v147, %v131
    %149 = vst.msk [vmem:[%s4] sm:$0xff] %vm145, %v148
  $region17: #{downblock2d.2} parent=0 // pred_fallthru
    _
  %s150 = sadd.s32 0, 0
  %p151 = scmp.lt.s32.totalorder %s150, 0
  %s152 = scalar_select %p151, %s150, 0
  %s153 = smul.addr %s152, 8
  %s154 = scalar_lea.vmem %s2, %s153
  // Predicated region
  $region18: #{downblock2d.2} parent=0 // pred_check
    _
  $region19: #{downblock2d.2} parent=0 // pred_check_branch
    %156 = sbr.rel (0) target = $region21
  $region20: #{downblock2d.2} parent=0 // pred_region
    %s157 = sadd.s32 0, 0
  $region21: #{downblock2d.2} parent=0 // pred_fallthru
    _
  // Predicated region
  $region22: #{downblock2d.2} parent=0 // pred_check
    _
  $region23: #{downblock2d.2} parent=0 // pred_check_branch
    %159 = sbr.rel (0) target = $region25
  $region24: #{downblock2d.2} parent=0 // pred_region
    _
  $region25: #{downblock2d.2} parent=0 // pred_fallthru
    _
  // Predicated region
  $region26: #{downblock2d.2} parent=0 // pred_check
    _
  $region27: #{downblock2d.2} parent=0 // pred_check_branch
    %161 = sbr.rel (0) target = $region29
  $region28: #{downblock2d.2} parent=0 // pred_region
    _
  $region29: #{downblock2d.2} parent=0 // pred_fallthru
    _
  // Predicated region
  $region30: #{downblock2d.2} parent=0 // pred_check
    _
  $region31: #{downblock2d.2} parent=0 // pred_check_branch
    %163 = sbr.rel (0) target = $region33
  $region32: #{downblock2d.2} parent=0 // pred_region
    %s164 = sadd.s32 0, 0
    %p165 = scmp.lt.s32.totalorder %s164, 0
    %s166 = scalar_select %p165, %s164, 0
    %s167 = smul.addr %s166, 8
    %s168 = scalar_lea.vmem %s2, %s167
  $region33: #{downblock2d.2} parent=0 // pred_fallthru
    _
  // Predicated region
  $region34: #{downblock2d.2} parent=0 // pred_check
    _
  $region35: #{downblock2d.2} parent=0 // pred_check_branch
    %170 = sbr.rel (0) target = $region37
  $region36: #{downblock2d.2} parent=0 // pred_region
    _
  $region37: #{downblock2d.2} parent=0 // pred_fallthru
    _
  // Predicated region
  $region38: #{downblock2d.2} parent=0 // pred_check
    _
  $region39: #{downblock2d.2} parent=0 // pred_check_branch
    %172 = sbr.rel (0) target = $region41
  $region40: #{downblock2d.2} parent=0 // pred_region
    _
  $region41: #{downblock2d.2} parent=0 // pred_fallthru
    _

</llo_original>
